<compile_context>
chip_gen: v7x
topology: tpu7x:2x2x1
jax: 0.10.0
libtpu: 0.0.40
codegen_flags: <defaults>
</compile_context>

<pallas_src>
import jax
import jax.numpy as jnp
from jax.experimental import pallas as pl
from jax.experimental.pallas import tpu as pltpu


def _round_up(x, m):
    return (x + m - 1) // m * m


def _ff_kernel(x_ref, w1_ref, b1_ref, w2_ref, b2_ref, o_ref, acc_ref):
    # x:  (TM, Ep) bf16    w1: (Ep, TH) bf16   b1: (1, TH) f32
    # w2: (TH, Ep) bf16    b2: (1, Ep)  f32    o:  (TM, Ep) out dtype
    # acc:(TM, Ep) f32 accumulator, resident across the H (reduction) axis.
    h_idx = pl.program_id(1)

    @pl.when(h_idx == 0)
    def _():
        acc_ref[...] = jnp.zeros_like(acc_ref)

    # First matmul tile + bias1 + ReLU (elementwise over H, so per-tile is exact).
    h = jnp.dot(x_ref[...], w1_ref[...], preferred_element_type=jnp.float32)
    h = jnp.maximum(h + b1_ref[...], 0.0)

    # Second matmul tile: accumulate (TM, Ep) contribution of this H-tile in f32.
    acc_ref[...] += jnp.dot(h.astype(w2_ref.dtype), w2_ref[...],
                            preferred_element_type=jnp.float32)

    @pl.when(h_idx == pl.num_programs(1) - 1)
    def _():
        # bias2 added once, in the finalize step only.
        o_ref[...] = (acc_ref[...] + b2_ref[...]).astype(o_ref.dtype)


def feed_forward(x, w1, b1, w2, b2, *, compute_dtype=jnp.bfloat16,
                 tm=256, th=512):
    """x: (..., E). w1: (E, H), b1: (H,), w2: (H, E), b2: (E,).
    Returns same shape/dtype as x (eval-mode FeedForward)."""
    orig_shape = x.shape
    E = orig_shape[-1]
    H = w1.shape[1]
    x2d = x.reshape(-1, E)
    M = x2d.shape[0]

    # Lane/sublane/MXU friendly padded sizes and tile sizes.
    Ep = _round_up(E, 128)                      # lane-dense features
    TM = min(tm, _round_up(M, 8))               # token tile (multiple of 8)
    Mp = _round_up(M, TM)
    TH = min(th, _round_up(H, 128))             # hidden (reduction) tile
    Hp = _round_up(H, TH)

    f32 = jnp.float32
    # Zero-pad + cast MXU operands to bf16; biases stay f32.
    xp = jnp.zeros((Mp, Ep), compute_dtype).at[:M, :E].set(
        x2d.astype(compute_dtype))
    w1p = jnp.zeros((Ep, Hp), compute_dtype).at[:E, :H].set(
        w1.astype(compute_dtype))
    w2p = jnp.zeros((Hp, Ep), compute_dtype).at[:H, :E].set(
        w2.astype(compute_dtype))
    b1p = jnp.zeros((1, Hp), f32).at[0, :H].set(b1.astype(f32))
    b2p = jnp.zeros((1, Ep), f32).at[0, :E].set(b2.astype(f32))

    grid = (Mp // TM, Hp // TH)

    flops = 4 * Mp * Ep * Hp  # two matmuls, 2 flops per MAC
    bytes_accessed = (xp.size * xp.dtype.itemsize
                      + w1p.size * w1p.dtype.itemsize
                      + w2p.size * w2p.dtype.itemsize
                      + b1p.size * 4 + b2p.size * 4
                      + Mp * Ep * jnp.dtype(x.dtype).itemsize)

    out = pl.pallas_call(
        _ff_kernel,
        out_shape=jax.ShapeDtypeStruct((Mp, Ep), x.dtype),
        grid_spec=pltpu.PrefetchScalarGridSpec(
            num_scalar_prefetch=0,
            grid=grid,
            in_specs=[
                pl.BlockSpec((TM, Ep), lambda i, h: (i, 0)),   # x tile
                pl.BlockSpec((Ep, TH), lambda i, h: (0, h)),   # w1 H-tile
                pl.BlockSpec((1, TH),  lambda i, h: (0, h)),   # b1 H-tile
                pl.BlockSpec((TH, Ep), lambda i, h: (h, 0)),   # w2 H-tile
                pl.BlockSpec((1, Ep),  lambda i, h: (0, 0)),   # b2 (constant)
            ],
            out_specs=pl.BlockSpec((TM, Ep), lambda i, h: (i, 0)),
            scratch_shapes=[pltpu.VMEM((TM, Ep), jnp.float32)],
        ),
        compiler_params=pltpu.CompilerParams(
            dimension_semantics=("parallel", "arbitrary"),
            vmem_limit_bytes=64 * 1024 * 1024,
        ),
        cost_estimate=pl.CostEstimate(flops=flops,
                                      transcendentals=0,
                                      bytes_accessed=bytes_accessed),
    )(xp, w1p, b1p, w2p, b2p)

    return out[:M, :E].reshape(orig_shape)


if __name__ == "__main__":
    # Small shapes consistent with the module: batch=2, seq=8, n_embedding=32.
    B, T, E = 2, 8, 32
    growth_factor = 4
    H = growth_factor * E

    key = jax.random.PRNGKey(0)
    kx, kw1, kb1, kw2, kb2 = jax.random.split(key, 5)

    x = jax.random.normal(kx, (B, T, E), dtype=jnp.float32)

    # Deterministic parameter init (PyTorch Linear-style uniform bounds).
    bound1 = 1.0 / (E ** 0.5)
    w1 = jax.random.uniform(kw1, (E, H), jnp.float32, -bound1, bound1)
    b1 = jax.random.uniform(kb1, (H,), jnp.float32, -bound1, bound1)
    bound2 = 1.0 / (H ** 0.5)
    w2 = jax.random.uniform(kw2, (H, E), jnp.float32, -bound2, bound2)
    b2 = jax.random.uniform(kb2, (E,), jnp.float32, -bound2, bound2)

    out = feed_forward(x, w1, b1, w2, b2)
    out = jax.block_until_ready(out)

    # Pure-JAX reference with matching bf16-operand / f32-accumulate semantics
    # (eval-mode: dropout = identity).
    cd = jnp.bfloat16
    x2d = x.reshape(-1, E)
    h_ref = jnp.maximum(
        jnp.dot(x2d.astype(cd), w1.astype(cd),
                preferred_element_type=jnp.float32) + b1, 0.0)
    ref = (jnp.dot(h_ref.astype(cd), w2.astype(cd),
                   preferred_element_type=jnp.float32) + b2).reshape(x.shape)

    assert out.shape == x.shape and out.dtype == x.dtype
    assert jnp.allclose(out, ref, atol=1e-3, rtol=1e-3), (
        float(jnp.max(jnp.abs(out - ref))))

    print("KERNEL_OK")
</pallas_src>

<mosaic_0001>
module attributes {stable_mosaic.version = 11 : i64} {
  func.func @_ff_kernel(%arg0: i32, %arg1: i32, %arg2: memref<16x128xbf16, #tpu.memory_space<vmem>>, %arg3: memref<128x128xbf16, #tpu.memory_space<vmem>>, %arg4: memref<1x128xf32, #tpu.memory_space<vmem>>, %arg5: memref<128x128xbf16, #tpu.memory_space<vmem>>, %arg6: memref<1x128xf32, #tpu.memory_space<vmem>>, %arg7: memref<16x128xf32, #tpu.memory_space<vmem>>, %arg8: memref<16x128xf32, #tpu.memory_space<vmem>>) attributes {dimension_semantics = [#tpu.dimension_semantics<parallel>, #tpu.dimension_semantics<arbitrary>], iteration_bounds = array<i64: 1, 1>, scalar_prefetch = 0 : i64, scratch_operands = 1 : i64, tpu.core_type = #tpu.core_type<tc>, window_params = [{transform_indices = @transform_0, window_bounds = array<i64: 16, 128>}, {transform_indices = @transform_1, window_bounds = array<i64: 128, 128>}, {transform_indices = @transform_2, window_bounds = array<i64: 1, 128>}, {transform_indices = @transform_3, window_bounds = array<i64: 128, 128>}, {pipeline_mode = #tpu.pipeline_mode<synchronous>, transform_indices = @transform_4, window_bounds = array<i64: 1, 128>}, {transform_indices = @transform_5, window_bounds = array<i64: 16, 128>}]} {
    %c0_i32 = arith.constant 0 : i32
    %0 = arith.cmpi eq, %arg1, %c0_i32 : i32
    %1 = arith.extui %0 : i1 to i32
    %c0_i32_0 = arith.constant 0 : i32
    %2 = arith.cmpi ne, %1, %c0_i32_0 : i32
    scf.if %2 {
      %cst_16 = arith.constant 0.000000e+00 : f32
      %20 = vector.broadcast %cst_16 : f32 to vector<16x128xf32>
      %c0_17 = arith.constant 0 : index
      %c0_18 = arith.constant 0 : index
      %21 = vector.load %arg8[%c0_17, %c0_18] : memref<16x128xf32, #tpu.memory_space<vmem>>, vector<16x128xf32>
      tpu.vector_store %arg8[%c0_17, %c0_18], %20 {strides = array<i32>} : memref<16x128xf32, #tpu.memory_space<vmem>>, vector<16x128xf32>,
    } else {
    }
    %c0 = arith.constant 0 : index
    %c0_1 = arith.constant 0 : index
    %3 = vector.load %arg2[%c0, %c0_1] : memref<16x128xbf16, #tpu.memory_space<vmem>>, vector<16x128xbf16>
    %c0_2 = arith.constant 0 : index
    %c0_3 = arith.constant 0 : index
    %4 = vector.load %arg3[%c0_2, %c0_3] : memref<128x128xbf16, #tpu.memory_space<vmem>>, vector<128x128xbf16>
    %cst = arith.constant dense<0.000000e+00> : vector<16x128xf32>
    %5 = tpu.matmul %3, %4, %cst {dimension_numbers = #tpu.dot_dimension_numbers<[1], [0], [0], [1], [0, 0, 1, 1], [], []>} : vector<16x128xbf16>, vector<128x128xbf16>, vector<16x128xf32> -> vector<16x128xf32>
    %c0_4 = arith.constant 0 : index
    %c0_5 = arith.constant 0 : index
    %6 = vector.load %arg4[%c0_4, %c0_5] : memref<1x128xf32, #tpu.memory_space<vmem>>, vector<1x128xf32>
    %7 = vector.broadcast %6 : vector<1x128xf32> to vector<16x128xf32>
    %8 = arith.addf %5, %7 : vector<16x128xf32>
    %cst_6 = arith.constant 0.000000e+00 : f32
    %9 = vector.broadcast %cst_6 : f32 to vector<16x128xf32>
    %10 = arith.maximumf %8, %9 : vector<16x128xf32>
    %c0_7 = arith.constant 0 : index
    %c0_8 = arith.constant 0 : index
    %11 = vector.load %arg8[%c0_7, %c0_8] : memref<16x128xf32, #tpu.memory_space<vmem>>, vector<16x128xf32>
    %12 = arith.truncf %10 : vector<16x128xf32> to vector<16x128xbf16>
    %c0_9 = arith.constant 0 : index
    %c0_10 = arith.constant 0 : index
    %13 = vector.load %arg5[%c0_9, %c0_10] : memref<128x128xbf16, #tpu.memory_space<vmem>>, vector<128x128xbf16>
    %cst_11 = arith.constant dense<0.000000e+00> : vector<16x128xf32>
    %14 = tpu.matmul %12, %13, %cst_11 {dimension_numbers = #tpu.dot_dimension_numbers<[1], [0], [0], [1], [0, 0, 1, 1], [], []>} : vector<16x128xbf16>, vector<128x128xbf16>, vector<16x128xf32> -> vector<16x128xf32>
    %15 = arith.addf %11, %14 : vector<16x128xf32>
    %c0_12 = arith.constant 0 : index
    %c0_13 = arith.constant 0 : index
    %16 = vector.load %arg8[%c0_12, %c0_13] : memref<16x128xf32, #tpu.memory_space<vmem>>, vector<16x128xf32>
    tpu.vector_store %arg8[%c0_12, %c0_13], %15 {strides = array<i32>} : memref<16x128xf32, #tpu.memory_space<vmem>>, vector<16x128xf32>,
    %c0_i32_14 = arith.constant 0 : i32
    %17 = arith.cmpi eq, %arg1, %c0_i32_14 : i32
    %18 = arith.extui %17 : i1 to i32
    %c0_i32_15 = arith.constant 0 : i32
    %19 = arith.cmpi ne, %18, %c0_i32_15 : i32
    scf.if %19 {
      %c0_16 = arith.constant 0 : index
      %c0_17 = arith.constant 0 : index
      %20 = vector.load %arg8[%c0_16, %c0_17] : memref<16x128xf32, #tpu.memory_space<vmem>>, vector<16x128xf32>
      %c0_18 = arith.constant 0 : index
      %c0_19 = arith.constant 0 : index
      %21 = vector.load %arg6[%c0_18, %c0_19] : memref<1x128xf32, #tpu.memory_space<vmem>>, vector<1x128xf32>
      %22 = vector.broadcast %21 : vector<1x128xf32> to vector<16x128xf32>
      %23 = arith.addf %20, %22 : vector<16x128xf32>
      %c0_20 = arith.constant 0 : index
      %c0_21 = arith.constant 0 : index
      %24 = vector.load %arg7[%c0_20, %c0_21] : memref<16x128xf32, #tpu.memory_space<vmem>>, vector<16x128xf32>
      tpu.vector_store %arg7[%c0_20, %c0_21], %23 {strides = array<i32>} : memref<16x128xf32, #tpu.memory_space<vmem>>, vector<16x128xf32>,
    } else {
    }
    return
  }
  func.func @transform_0(%arg0: i32, %arg1: i32) -> (i32, i32) {
    %c0_i32 = arith.constant 0 : i32
    %c0_i32_0 = arith.constant 0 : i32
    return %arg0, %c0_i32 : i32, i32
  }
  func.func @transform_1(%arg0: i32, %arg1: i32) -> (i32, i32) {
    %c0_i32 = arith.constant 0 : i32
    %c0_i32_0 = arith.constant 0 : i32
    return %c0_i32, %arg1 : i32, i32
  }
  func.func @transform_2(%arg0: i32, %arg1: i32) -> (i32, i32) {
    %c0_i32 = arith.constant 0 : i32
    %c0_i32_0 = arith.constant 0 : i32
    return %c0_i32, %arg1 : i32, i32
  }
  func.func @transform_3(%arg0: i32, %arg1: i32) -> (i32, i32) {
    %c0_i32 = arith.constant 0 : i32
    %c0_i32_0 = arith.constant 0 : i32
    return %arg1, %c0_i32 : i32, i32
  }
  func.func @transform_4(%arg0: i32, %arg1: i32) -> (i32, i32) {
    %c0_i32 = arith.constant 0 : i32
    %c0_i32_0 = arith.constant 0 : i32
    %c0_i32_1 = arith.constant 0 : i32
    return %c0_i32, %c0_i32_0 : i32, i32
  }
  func.func @transform_5(%arg0: i32, %arg1: i32) -> (i32, i32) {
    %c0_i32 = arith.constant 0 : i32
    %c0_i32_0 = arith.constant 0 : i32
    return %arg0, %c0_i32 : i32, i32
  }
}

</mosaic_0001>

<llo_original>
// kernel: tpu_custom_call.1
$region0: #{tpu_custom_call.1}
  #allocation0 [shape = 'u32[]', space=smem, size = 0x4, offset = 0x4, fixed_abs, tag = 'smem constant byte address 0x4 - core index']
  #allocation1 [shape = 'u32[144,128]{1,0:T(1,128)}', space=vmem, size = 0x12000, scoped, tag = 'internal scratch']
  #allocation2 [shape = 'f32[16,128]{1,0:T(8,128)}', space=vmem, size = 0x2000, scoped, tag = 'scratch operand']
  %s0 = inlined_call_operand.hbm [shape: bf16[16,128], index: 0, kind: input, shape index: {}]
  %s1 = inlined_call_operand.hbm [shape: bf16[128,128], index: 1, kind: input, shape index: {}]
  %s2 = inlined_call_operand.hbm [shape: f32[1,128], index: 2, kind: input, shape index: {}]
  %s3 = inlined_call_operand.hbm [shape: bf16[128,128], index: 3, kind: input, shape index: {}]
  %s4 = inlined_call_operand.hbm [shape: f32[1,128], index: 4, kind: input, shape index: {}]
  %s5 = inlined_call_operand.hbm [shape: f32[16,128], index: 5, kind: output, shape index: {}]
  %s6 = sld [smem:[#allocation0]]
  $region58: #{tpu_custom_call.1} parent=0
    _
  %s8 = ssub.s32 1, %s6
  %s9 = scalar_select 0, %s8, %s6
  $region1: #{tpu_custom_call.1} parent=0
    #allocation3 [shape = 'u8[4096]{0}', space=vmem, size = 0x1000, scoped, tag = 'input window, operand 0, single buffered']
    #allocation4 [shape = 's32[1]{0}', space=sflag, size = 0x4, scoped, tag = 'scoped memory for tpu_custom_call.1']
    #allocation5 [shape = 's32[1]{0}', space=sflag, size = 0x4, scoped, tag = 'scoped memory for tpu_custom_call.1']
    #allocation6 [shape = 'u8[32768]{0}', space=vmem, size = 0x8000, scoped, tag = 'input window, operand 1, single buffered']
    #allocation7 [shape = 's32[1]{0}', space=sflag, size = 0x4, scoped, tag = 'scoped memory for tpu_custom_call.1']
    #allocation8 [shape = 'u8[512]{0}', space=vmem, size = 0x400, scoped, tag = 'input window, operand 2, single buffered']
    #allocation9 [shape = 'u8[32768]{0}', space=vmem, size = 0x8000, scoped, tag = 'input window, operand 3, single buffered']
    #allocation10 [shape = 's32[1]{0}', space=sflag, size = 0x4, scoped, tag = 'scoped memory for tpu_custom_call.1']
    #allocation11 [shape = 'u8[512]{0}', space=vmem, size = 0x400, scoped, tag = 'input window, operand 4, single buffered']
    #allocation12 [shape = 'u8[8192]{0}', space=vmem, size = 0x2000, scoped, tag = 'output window, operand 0, single buffered']
    %10 = vsyncpa [#allocation4], 0
    %11 = vsyncpa [#allocation7], 0
    %12 = vsyncpa [#allocation10], 0
    %13 = vsyncpa [#allocation5], 0
    // Predicated region
    $region2: #{tpu_custom_call.1} parent=1 // pred_check
      _
    $region3: #{tpu_custom_call.1} parent=1 // pred_check_branch
      %15 = sbr.rel (0) target = $region5
    $region4: #{tpu_custom_call.1} parent=1 // pred_region
      %s17 = ssub.s32 128, 128
      %18 = vsyncadd [#allocation4], %s17
      %s19 = sshll.u32 [#allocation3], 4
      %s20 = int_to_ptr.vmem [resolvable:$true] %s19
      %25 = dma.hbm_to_vmem [thread:$0]  %s0, 128, %s20, [#allocation4], 64, 64, 4
    $region5: #{tpu_custom_call.1} parent=1 // pred_fallthru
      _
    // Predicated region
    $region6: #{tpu_custom_call.1} parent=1 // pred_check
      _
    $region7: #{tpu_custom_call.1} parent=1 // pred_check_branch
      %27 = sbr.rel (0) target = $region9
    $region8: #{tpu_custom_call.1} parent=1 // pred_region
      %s29 = ssub.s32 1024, 1024
      %30 = vsyncadd [#allocation7], %s29
      %s31 = sshll.u32 [#allocation6], 4
      %s32 = int_to_ptr.vmem [resolvable:$true] %s31
      %37 = dma.hbm_to_vmem [thread:$0]  %s1, 1024, %s32, [#allocation7], 64, 64, 4
    $region9: #{tpu_custom_call.1} parent=1 // pred_fallthru
      _
    // Predicated region
    $region10: #{tpu_custom_call.1} parent=1 // pred_check
      _
    $region11: #{tpu_custom_call.1} parent=1 // pred_check_branch
      %39 = sbr.rel (0) target = $region13
    $region12: #{tpu_custom_call.1} parent=1 // pred_region
      %s41 = ssub.s32 16, 16
      %42 = vsyncadd [#allocation7], %s41
      %s44 = sshll.u32 [#allocation8], 4
      %s45 = int_to_ptr.vmem [resolvable:$true] %s44
      %47 = dma.hbm_to_vmem [thread:$0]  %s2, 16, %s45, [#allocation7]
    $region13: #{tpu_custom_call.1} parent=1 // pred_fallthru
      _
    // Predicated region
    $region14: #{tpu_custom_call.1} parent=1 // pred_check
      _
    $region15: #{tpu_custom_call.1} parent=1 // pred_check_branch
      %49 = sbr.rel (0) target = $region17
    $region16: #{tpu_custom_call.1} parent=1 // pred_region
      %s51 = ssub.s32 1024, 1024
      %52 = vsyncadd [#allocation10], %s51
      %s53 = sshll.u32 [#allocation9], 4
      %s54 = int_to_ptr.vmem [resolvable:$true] %s53
      %59 = dma.hbm_to_vmem [thread:$0]  %s3, 1024, %s54, [#allocation10], 64, 64, 4
    $region17: #{tpu_custom_call.1} parent=1 // pred_fallthru
      _
    // Predicated region
    $region18: #{tpu_custom_call.1} parent=1 // pred_check
      _
    $region19: #{tpu_custom_call.1} parent=1 // pred_check_branch
      %61 = sbr.rel (0) target = $region21
    $region20: #{tpu_custom_call.1} parent=1 // pred_region
      %s63 = ssub.s32 16, 16
      %64 = vsyncadd [#allocation10], %s63
      %s66 = sshll.u32 [#allocation11], 4
      %s67 = int_to_ptr.vmem [resolvable:$true] %s66
      %69 = dma.hbm_to_vmem [thread:$0]  %s4, 16, %s67, [#allocation10]
    $region21: #{tpu_custom_call.1} parent=1 // pred_fallthru
      _
    // Predicated region
    $region22: #{tpu_custom_call.1} parent=1 // pred_check
      _
    $region23: #{tpu_custom_call.1} parent=1 // pred_check_branch
      %71 = sbr.rel (0) target = $region25
    $region24: #{tpu_custom_call.1} parent=1 // pred_region
      %72 = dma.done [#allocation4], 128
    $region25: #{tpu_custom_call.1} parent=1 // pred_fallthru
      _
    // Predicated region
    $region26: #{tpu_custom_call.1} parent=1 // pred_check
      _
    $region27: #{tpu_custom_call.1} parent=1 // pred_check_branch
      %74 = sbr.rel (0) target = $region29
    $region28: #{tpu_custom_call.1} parent=1 // pred_region
      %75 = dma.done [#allocation7], 1024
    $region29: #{tpu_custom_call.1} parent=1 // pred_fallthru
      _
    // Predicated region
    $region30: #{tpu_custom_call.1} parent=1 // pred_check
      _
    $region31: #{tpu_custom_call.1} parent=1 // pred_check_branch
      %77 = sbr.rel (0) target = $region33
    $region32: #{tpu_custom_call.1} parent=1 // pred_region
      %78 = dma.done [#allocation7], 16
    $region33: #{tpu_custom_call.1} parent=1 // pred_fallthru
      _
    // Predicated region
    $region34: #{tpu_custom_call.1} parent=1 // pred_check
      _
    $region35: #{tpu_custom_call.1} parent=1 // pred_check_branch
      %80 = sbr.rel (0) target = $region37
    $region36: #{tpu_custom_call.1} parent=1 // pred_region
      %81 = dma.done [#allocation10], 1024
    $region37: #{tpu_custom_call.1} parent=1 // pred_fallthru
      _
    // Predicated region
    $region38: #{tpu_custom_call.1} parent=1 // pred_check
      _
    $region39: #{tpu_custom_call.1} parent=1 // pred_check_branch
      %83 = sbr.rel (0) target = $region41
    $region40: #{tpu_custom_call.1} parent=1 // pred_region
      %84 = dma.done [#allocation10], 16
    $region41: #{tpu_custom_call.1} parent=1 // pred_fallthru
      _
    %p86 = scmp.eq.s32.totalorder 0, 0
    // Predicated region
    $region42: #{tpu_custom_call.1} parent=1 // pred_check
      %p87 = pneg %p86
    $region43: #{tpu_custom_call.1} parent=1 // pred_check_branch
      %89 = sbr.rel (%p87) target = $region45
    $region44: #{tpu_custom_call.1} parent=1 // pred_region
      %90 = vst [vmem:[#allocation2] sm:$0xff] 0.0
      %91 = vst [vmem:[#allocation2 + $0x8] sm:$0xff] 0.0
    $region45: #{tpu_custom_call.1} parent=1 // pred_fallthru
      _
    %v92 = vld [vmem:[#allocation3] sm:$0xf]
    %v93 = vld [vmem:[#allocation3 + $0x4] sm:$0xf]
    %v94 = vld [vmem:[#allocation6] sm:$0xf]
    %v95 = vld [vmem:[#allocation6 + $0x4] sm:$0xf]
    %v96 = vld [vmem:[#allocation6 + $0x8] sm:$0xf]
    %v97 = vld [vmem:[#allocation6 + $0xc] sm:$0xf]
    %v98 = vld [vmem:[#allocation6 + $0x10] sm:$0xf]
    %v99 = vld [vmem:[#allocation6 + $0x14] sm:$0xf]
    %v100 = vld [vmem:[#allocation6 + $0x18] sm:$0xf]
    %v101 = vld [vmem:[#allocation6 + $0x1c] sm:$0xf]
    %v102 = vld [vmem:[#allocation6 + $0x20] sm:$0xf]
    %v103 = vld [vmem:[#allocation6 + $0x24] sm:$0xf]
    %v104 = vld [vmem:[#allocation6 + $0x28] sm:$0xf]
    %v105 = vld [vmem:[#allocation6 + $0x2c] sm:$0xf]
    %v106 = vld [vmem:[#allocation6 + $0x30] sm:$0xf]
    %v107 = vld [vmem:[#allocation6 + $0x34] sm:$0xf]
    %v108 = vld [vmem:[#allocation6 + $0x38] sm:$0xf]
    %v109 = vld [vmem:[#allocation6 + $0x3c] sm:$0xf]
    %v110 = vld [vmem:[#allocation8] sm:$0x1]
    %v112 = vlaneseq
    %v113 = vshrl.u32 %v112, 7
    %v114 = vsub.s32 0, %v113
    %v115 = vrot.slane %v110, %v114
    %v119 = vunpack.c.l.b16 %v92
    %v120 = vunpack.c.l.b16 %v93
    %v121 = vpack.c.b16 %v120, %v119
    %v139 = vunpack.c.l.b16 %v94
    %v140 = vunpack.c.l.b16 %v95
    %v141 = vunpack.c.l.b16 %v96
    %v142 = vunpack.c.l.b16 %v97
    %v143 = vunpack.c.l.b16 %v98
    %v144 = vunpack.c.l.b16 %v99
    %v145 = vunpack.c.l.b16 %v100
    %v146 = vunpack.c.l.b16 %v101
    %v147 = vunpack.c.l.b16 %v102
    %v148 = vunpack.c.l.b16 %v103
    %v149 = vunpack.c.l.b16 %v104
    %v150 = vunpack.c.l.b16 %v105
    %v151 = vunpack.c.l.b16 %v106
    %v152 = vunpack.c.l.b16 %v107
    %v153 = vunpack.c.l.b16 %v108
    %v154 = vunpack.c.l.b16 %v109
    %v155 = vpack.c.b16 %v140, %v139
    %v156 = vpack.c.b16 %v142, %v141
    %v157 = vpack.c.b16 %v144, %v143
    %v158 = vpack.c.b16 %v146, %v145
    %v159 = vpack.c.b16 %v148, %v147
    %v160 = vpack.c.b16 %v150, %v149
    %v161 = vpack.c.b16 %v152, %v151
    %v162 = vpack.c.b16 %v154, %v153
    %171 = vmatprep.subr.bf16.mxu0 0
    %172 = vmatpush1.bf16.msra.mxu0 %v155
    %173 = vmatprep.subr.bf16.mxu0 0
    %174 = vmatpush1.bf16.msra.mxu0 %v156
    %175 = vmatprep.subr.bf16.mxu0 0
    %176 = vmatpush1.bf16.msra.mxu0 %v157
    %177 = vmatprep.subr.bf16.mxu0 0
    %178 = vmatpush1.bf16.msra.mxu0 %v158
    %179 = vmatprep.subr.bf16.mxu0 0
    %180 = vmatpush1.bf16.msra.mxu0 %v159
    %181 = vmatprep.subr.bf16.mxu0 0
    %182 = vmatpush1.bf16.msra.mxu0 %v160
    %183 = vmatprep.subr.bf16.mxu0 0
    %184 = vmatpush1.bf16.msra.mxu0 %v161
    %185 = vmatprep.subr.bf16.mxu0 0
    %186 = vmatpush1.bf16.msra.mxu0 %v162
    %187 = vmatprep.subr.bf16.mxu0 0
    %188 = vmatpush1.bf16.msra.mxu0 0
    %189 = vmatprep.subr.bf16.mxu0 0
    %190 = vmatpush1.bf16.msra.mxu0 0
    %191 = vmatprep.subr.bf16.mxu0 0
    %192 = vmatpush1.bf16.msra.mxu0 0
    %193 = vmatprep.subr.bf16.mxu0 0
    %194 = vmatpush1.bf16.msra.mxu0 0
    %195 = vmatprep.subr.bf16.mxu0 0
    %196 = vmatpush1.bf16.msra.mxu0 0
    %197 = vmatprep.subr.bf16.mxu0 0
    %198 = vmatpush1.bf16.msra.mxu0 0
    %199 = vmatprep.subr.bf16.mxu0 0
    %200 = vmatpush1.bf16.msra.mxu0 0
    %201 = vmatprep.subr.bf16.mxu0 0
    %202 = vmatpush1.bf16.msra.mxu0 0
    %203 = vmatprep.mubr.bf16.mxu0 0
    %204 = vmatmul.mubr.bf16.gmra.mrb[0].mxu0 %v121
    %v205 = vpop.f32.mrb[0].mxu0
    %v206 = vadd.f32 %v115, %v205
    %v207 = vpop.f32.mrb[0].mxu0
    %v208 = vpop.f32.mrb[0].mxu0
    %v209 = vadd.f32 %v115, %v208
    %v210 = vpop.f32.mrb[0].mxu0
    %211 = vdwg.mxu0
    %v212 = vmax.f32 %v206, 0.0
    %v213 = vmax.f32 %v209, 0.0
    %v214 = vld [vmem:[#allocation2] sm:$0xff]
    %v215 = vld [vmem:[#allocation2 + $0x8] sm:$0xff]
    %v216 = vpack.c.bf16 %v213, %v212
    %v217 = vld [vmem:[#allocation9] sm:$0xf]
    %v218 = vld [vmem:[#allocation9 + $0x4] sm:$0xf]
    %v219 = vld [vmem:[#allocation9 + $0x8] sm:$0xf]
    %v220 = vld [vmem:[#allocation9 + $0xc] sm:$0xf]
    %v221 = vld [vmem:[#allocation9 + $0x10] sm:$0xf]
    %v222 = vld [vmem:[#allocation9 + $0x14] sm:$0xf]
    %v223 = vld [vmem:[#allocation9 + $0x18] sm:$0xf]
    %v224 = vld [vmem:[#allocation9 + $0x1c] sm:$0xf]
    %v225 = vld [vmem:[#allocation9 + $0x20] sm:$0xf]
    %v226 = vld [vmem:[#allocation9 + $0x24] sm:$0xf]
    %v227 = vld [vmem:[#allocation9 + $0x28] sm:$0xf]
    %v228 = vld [vmem:[#allocation9 + $0x2c] sm:$0xf]
    %v229 = vld [vmem:[#allocation9 + $0x30] sm:$0xf]
    %v230 = vld [vmem:[#allocation9 + $0x34] sm:$0xf]
    %v231 = vld [vmem:[#allocation9 + $0x38] sm:$0xf]
    %v232 = vld [vmem:[#allocation9 + $0x3c] sm:$0xf]
    %v249 = vunpack.c.l.b16 %v217
    %v250 = vunpack.c.l.b16 %v218
    %v251 = vunpack.c.l.b16 %v219
    %v252 = vunpack.c.l.b16 %v220
    %v253 = vunpack.c.l.b16 %v221
    %v254 = vunpack.c.l.b16 %v222
    %v255 = vunpack.c.l.b16 %v223
    %v256 = vunpack.c.l.b16 %v224
    %v257 = vunpack.c.l.b16 %v225
    %v258 = vunpack.c.l.b16 %v226
    %v259 = vunpack.c.l.b16 %v227
    %v260 = vunpack.c.l.b16 %v228
    %v261 = vunpack.c.l.b16 %v229
    %v262 = vunpack.c.l.b16 %v230
    %v263 = vunpack.c.l.b16 %v231
    %v264 = vunpack.c.l.b16 %v232
    %v265 = vpack.c.b16 %v250, %v249
    %v266 = vpack.c.b16 %v252, %v251
    %v267 = vpack.c.b16 %v254, %v253
    %v268 = vpack.c.b16 %v256, %v255
    %v269 = vpack.c.b16 %v258, %v257
    %v270 = vpack.c.b16 %v260, %v259
    %v271 = vpack.c.b16 %v262, %v261
    %v272 = vpack.c.b16 %v264, %v263
    %281 = vmatprep.subr.bf16.mxu0 0
    %282 = vmatpush1.bf16.msra.mxu0 %v265
    %283 = vmatprep.subr.bf16.mxu0 0
    %284 = vmatpush1.bf16.msra.mxu0 %v266
    %285 = vmatprep.subr.bf16.mxu0 0
    %286 = vmatpush1.bf16.msra.mxu0 %v267
    %287 = vmatprep.subr.bf16.mxu0 0
    %288 = vmatpush1.bf16.msra.mxu0 %v268
    %289 = vmatprep.subr.bf16.mxu0 0
    %290 = vmatpush1.bf16.msra.mxu0 %v269
    %291 = vmatprep.subr.bf16.mxu0 0
    %292 = vmatpush1.bf16.msra.mxu0 %v270
    %293 = vmatprep.subr.bf16.mxu0 0
    %294 = vmatpush1.bf16.msra.mxu0 %v271
    %295 = vmatprep.subr.bf16.mxu0 0
    %296 = vmatpush1.bf16.msra.mxu0 %v272
    %297 = vmatprep.subr.bf16.mxu0 0
    %298 = vmatpush1.bf16.msra.mxu0 0
    %299 = vmatprep.subr.bf16.mxu0 0
    %300 = vmatpush1.bf16.msra.mxu0 0
    %301 = vmatprep.subr.bf16.mxu0 0
    %302 = vmatpush1.bf16.msra.mxu0 0
    %303 = vmatprep.subr.bf16.mxu0 0
    %304 = vmatpush1.bf16.msra.mxu0 0
    %305 = vmatprep.subr.bf16.mxu0 0
    %306 = vmatpush1.bf16.msra.mxu0 0
    %307 = vmatprep.subr.bf16.mxu0 0
    %308 = vmatpush1.bf16.msra.mxu0 0
    %309 = vmatprep.subr.bf16.mxu0 0
    %310 = vmatpush1.bf16.msra.mxu0 0
    %311 = vmatprep.subr.bf16.mxu0 0
    %312 = vmatpush1.bf16.msra.mxu0 0
    %313 = vmatprep.mubr.bf16.mxu0 0
    %314 = vmatmul.mubr.bf16.gmra.mrb[0].mxu0 %v216
    %v315 = vpop.f32.mrb[0].mxu0
    %v316 = vadd.f32 0.0, %v315
    %v317 = vpop.f32.mrb[0].mxu0
    %v318 = vpop.f32.mrb[0].mxu0
    %v319 = vadd.f32 0.0, %v318
    %v320 = vpop.f32.mrb[0].mxu0
    %321 = vdwg.mxu0
    %v322 = vadd.f32 %v214, %v316
    %v323 = vadd.f32 %v215, %v319
    %324 = vst [vmem:[#allocation2] sm:$0xff] %v322
    %325 = vst [vmem:[#allocation2 + $0x8] sm:$0xff] %v323
    // Predicated region
    $region46: #{tpu_custom_call.1} parent=1 // pred_check
      %p326 = pneg %p86
    $region47: #{tpu_custom_call.1} parent=1 // pred_check_branch
      %328 = sbr.rel (%p326) target = $region49
    $region48: #{tpu_custom_call.1} parent=1 // pred_region
      %v329 = vld [vmem:[#allocation2] sm:$0xff]
      %v330 = vld [vmem:[#allocation2 + $0x8] sm:$0xff]
      %v331 = vld [vmem:[#allocation11] sm:$0x1]
      %v333 = vlaneseq
      %v334 = vshrl.u32 %v333, 7
      %v335 = vsub.s32 0, %v334
      %v336 = vrot.slane %v331, %v335
      %v338 = vadd.f32 %v329, %v336
      %v339 = vadd.f32 %v330, %v336
      %340 = vst [vmem:[#allocation12] sm:$0xff] %v338
      %341 = vst [vmem:[#allocation12 + $0x8] sm:$0xff] %v339
    $region49: #{tpu_custom_call.1} parent=1 // pred_fallthru
      _
    // Predicated region
    $region50: #{tpu_custom_call.1} parent=1 // pred_check
      _
    $region51: #{tpu_custom_call.1} parent=1 // pred_check_branch
      %343 = sbr.rel (0) target = $region53
    $region52: #{tpu_custom_call.1} parent=1 // pred_region
      %s345 = ssub.s32 256, 256
      %346 = vsyncadd [#allocation5], %s345
      %s347 = sshll.u32 [#allocation12], 4
      %s348 = int_to_ptr.vmem [resolvable:$true] %s347
      %353 = dma.vmem_to_hbm [thread:$0]  %s348, 256, %s5, [#allocation5], 128, 128, 8
    $region53: #{tpu_custom_call.1} parent=1 // pred_fallthru
      _
    // Predicated region
    $region54: #{tpu_custom_call.1} parent=1 // pred_check
      _
    $region55: #{tpu_custom_call.1} parent=1 // pred_check_branch
      %355 = sbr.rel (0) target = $region57
    $region56: #{tpu_custom_call.1} parent=1 // pred_region
      %356 = dma.done [#allocation5], 256
    $region57: #{tpu_custom_call.1} parent=1 // pred_fallthru
      _
    %357 = vsyncpa [#allocation4], 1
    %358 = vsyncpa [#allocation7], 1
    %359 = vsyncpa [#allocation10], 1
    %360 = vsyncpa [#allocation5], 1

</llo_original>
